<compile_context>
chip_gen: v5e
topology: v5e:2x2
jax: 0.10.0
libtpu: 0.0.40
codegen_flags: <defaults>
</compile_context>

<pallas_src>
import jax
import jax.numpy as jnp
from jax.experimental import pallas as pl
from jax.experimental.pallas import tpu as pltpu


# ----------------------------------------------------------------------------
# Kernels
# ----------------------------------------------------------------------------
def _mish_kernel(x_ref, o_ref):
    """mish(x) = x * tanh(softplus(x)), written as a rational in t = exp(-|x|):

        tanh(softplus(x)) = (t*t + 2*t) / (t*t + 2*t + 2)     for x <= 0
                          = (1 + 2*t)   / (1 + 2*t + 2*t*t)   for x  > 0

    One EUP transcendental (exp) + one approximate EUP reciprocal instead of
    exp + log1p + tanh (3 EUP pushes) — keeps the kernel on the HBM roofline
    on v7x; neutral-to-positive on v6e/v5e.
    """
    x = x_ref[...].astype(jnp.float32)
    t = jnp.exp(-jnp.abs(x))
    tt = t * t
    pos = x > 0.0
    num = jnp.where(pos, 1.0 + 2.0 * t, tt + 2.0 * t)
    den = jnp.where(pos, 1.0 + 2.0 * t + 2.0 * tt, tt + 2.0 * t + 2.0)
    # EUP approx reciprocal + two Newton-Raphson steps (cheap VPU ops) ≈ exact.
    r = pl.reciprocal(den, approx=True)
    r = r * (2.0 - den * r)
    r = r * (2.0 - den * r)
    o_ref[...] = (x * num * r).astype(o_ref.dtype)


def _softplus(x):
    # numerically stable softplus == F.softplus
    return jnp.log1p(jnp.exp(-jnp.abs(x))) + jnp.maximum(x, 0.0)


def _evidential_kernel(p0, l0, a0, b0, p1, l1, a1, b1, p2, l2, a2, b2,
                       u_o, la_o, al_o, be_o):
    """Fused EvidentialModule head: evidence() on each scale's (logla, logalpha,
    logbeta) maps followed by moe_nig combination (combine_uncertainty)."""
    def nig(p_ref, l_ref, a_ref, b_ref):
        u = p_ref[...].astype(jnp.float32)
        la = _softplus(l_ref[...].astype(jnp.float32))
        al = _softplus(a_ref[...].astype(jnp.float32)) + 1.0
        be = _softplus(b_ref[...].astype(jnp.float32))
        return u, la, al, be

    u, la, al, be = nig(p0, l0, a0, b0)
    for refs in ((p1, l1, a1, b1), (p2, l2, a2, b2)):
        u2, la2, al2, be2 = nig(*refs)
        la_n = la + la2
        u_n = (la * u + la2 * u2) / la_n
        al_n = al + al2 + 0.5
        be_n = be + be2 + 0.5 * (la * (u - u_n) ** 2 + la2 * (u2 - u_n) ** 2)
        u, la, al, be = u_n, la_n, al_n, be_n

    u_o[...] = u.astype(u_o.dtype)
    la_o[...] = la.astype(la_o.dtype)
    al_o[...] = al.astype(al_o.dtype)
    be_o[...] = be.astype(be_o.dtype)


# ----------------------------------------------------------------------------
# Generic lane-dense elementwise runner
# ----------------------------------------------------------------------------
_SUBLANE_MULTIPLE = {4: 8, 2: 16, 1: 32}          # dtype itemsize -> sublane mult
_LANE_CANDIDATES = (4096, 2048, 1024, 512, 256, 128)
_VMEM_BUDGET_BYTES = 12 * 1024 * 1024             # total pipelined footprint
                                                  # (< 16 MiB v5e scoped VMEM)


def _elementwise_pallas(kernel_fn, inputs, num_outputs=1, cost_estimate=None):
    """Run an elementwise kernel over same-shaped inputs via a (rows, lanes)
    lane-dense slab with large, sublane-aligned blocks."""
    x0 = inputs[0]
    shape, dtype = x0.shape, x0.dtype
    total = x0.size
    itemsize = jnp.dtype(dtype).itemsize
    sub = _SUBLANE_MULTIPLE.get(itemsize, 8)

    # Pick a wide lane dimension that divides the flat size -> no pad, no copy.
    lanes = None
    for cand in _LANE_CANDIDATES:                 # prefer rows % sublane == 0
        if total % cand == 0 and (total // cand) % sub == 0:
            lanes = cand
            break
    if lanes is None:
        for cand in _LANE_CANDIDATES:             # full-slab block still fine
            if total % cand == 0:
                lanes = cand
                break

    flats = [jnp.reshape(v, (-1,)) for v in inputs]
    if lanes is None:
        # TODO(synk): this fallback pads (copies) the flat array; only reached
        # when the element count is not a multiple of 128.
        lanes = 128
        pad = (-total) % lanes
        flats = [jnp.concatenate([f, jnp.zeros((pad,), f.dtype)]) for f in flats]
    rows = flats[0].size // lanes
    slabs = [jnp.reshape(f, (rows, lanes)) for f in flats]

    # Block rows: split the VMEM budget over (inputs + outputs) x double buffer,
    # rounded to the dtype's sublane multiple. No divisor-shrink loop: grid uses
    # cdiv and Pallas handles the partial last block.
    n_streams = len(slabs) + num_outputs
    per_block_bytes = max(_VMEM_BUDGET_BYTES // (2 * n_streams),
                          sub * lanes * itemsize)
    tr = max(per_block_bytes // (lanes * itemsize), sub)
    tr = (tr // sub) * sub
    if tr >= rows:
        tr = rows                                  # single block == full array dim
    grid = (pl.cdiv(rows, tr),)

    spec = pl.BlockSpec((tr, lanes), lambda i: (i, 0))
    if num_outputs == 1:
        out_shape = jax.ShapeDtypeStruct((rows, lanes), dtype)
        out_specs = spec
    else:
        out_shape = tuple(jax.ShapeDtypeStruct((rows, lanes), dtype)
                          for _ in range(num_outputs))
        out_specs = [spec] * num_outputs

    result = pl.pallas_call(
        kernel_fn,
        out_shape=out_shape,
        grid_spec=pltpu.PrefetchScalarGridSpec(
            num_scalar_prefetch=0,
            grid=grid,
            in_specs=[spec] * len(slabs),
            out_specs=out_specs,
        ),
        compiler_params=pltpu.CompilerParams(
            dimension_semantics=("parallel",),     # shards grid across TCs (v7x)
        ),
        cost_estimate=cost_estimate,
    )(*slabs)

    outs = (result,) if num_outputs == 1 else tuple(result)

    def unslab(o):
        flat = jnp.reshape(o, (-1,))
        if flat.size != total:
            flat = flat[:total]
        return jnp.reshape(flat, shape)

    outs = tuple(unslab(o) for o in outs)
    return outs[0] if num_outputs == 1 else outs


# ----------------------------------------------------------------------------
# Public wrappers
# ----------------------------------------------------------------------------
def mish(x):
    """Elementwise Mish (the Mish()/FMish() activation of EvidentialModule)."""
    n = x.size
    ce = pl.CostEstimate(flops=12 * n, transcendentals=2 * n,
                         bytes_accessed=2 * n * jnp.dtype(x.dtype).itemsize)
    return _elementwise_pallas(_mish_kernel, [x], num_outputs=1,
                               cost_estimate=ce)


def evidential_combine(preds, loglas, logalphas, logbetas):
    """evidence(softplus) + combine_uncertainty(moe_nig) over 3 scales.
    Each argument is a list of 3 same-shaped maps; returns (u, la, alpha, beta)."""
    inputs = []
    for i in range(3):
        inputs += [preds[i], loglas[i], logalphas[i], logbetas[i]]
    n = preds[0].size
    ce = pl.CostEstimate(flops=60 * n, transcendentals=9 * n,
                         bytes_accessed=16 * n * jnp.dtype(preds[0].dtype).itemsize)
    return _elementwise_pallas(_evidential_kernel, inputs, num_outputs=4,
                               cost_estimate=ce)


# ----------------------------------------------------------------------------
# Pure-JAX references
# ----------------------------------------------------------------------------
def _mish_ref(x):
    xf = x.astype(jnp.float32)
    return (xf * jnp.tanh(jax.nn.softplus(xf))).astype(x.dtype)


def _evidential_ref(preds, loglas, logalphas, logbetas):
    sp = jax.nn.softplus
    u, la = preds[0], sp(loglas[0])
    al, be = sp(logalphas[0]) + 1.0, sp(logbetas[0])
    for i in (1, 2):
        u2, la2 = preds[i], sp(loglas[i])
        al2, be2 = sp(logalphas[i]) + 1.0, sp(logbetas[i])
        la_n = la + la2
        u_n = (la * u + la2 * u2) / la_n
        al_n = al + al2 + 0.5
        be_n = be + be2 + 0.5 * (la * (u - u_n) ** 2 + la2 * (u2 - u_n) ** 2)
        u, la, al, be = u_n, la_n, al_n, be_n
    return u, la, al, be


# ----------------------------------------------------------------------------
if __name__ == "__main__":
    key = jax.random.PRNGKey(0)
    k_mish, k_ev = jax.random.split(key)

    # --- Mish activation -----------------------------------------------------
    x = jax.random.normal(k_mish, (2, 4, 16, 16), dtype=jnp.float32) * 3.0
    y = jax.block_until_ready(mish(x))
    y_ref = _mish_ref(x)
    assert y.shape == x.shape and y.dtype == x.dtype
    assert jnp.allclose(y, y_ref, atol=1e-5, rtol=1e-5)

    # --- Evidential head (3 scales of pred / logla / logalpha / logbeta) ----
    maps = jax.random.normal(k_ev, (12, 2, 16, 16), dtype=jnp.float32)
    preds = [maps[0], maps[4], maps[8]]
    loglas = [maps[1], maps[5], maps[9]]
    logalphas = [maps[2], maps[6], maps[10]]
    logbetas = [maps[3], maps[7], maps[11]]

    u, la, alpha, beta = evidential_combine(preds, loglas, logalphas, logbetas)
    jax.block_until_ready(beta)
    u_r, la_r, al_r, be_r = _evidential_ref(preds, loglas, logalphas, logbetas)
    for got, ref in ((u, u_r), (la, la_r), (alpha, al_r), (beta, be_r)):
        assert got.shape == ref.shape
        assert jnp.allclose(got, ref, atol=1e-5, rtol=1e-5)

    # Mirror the module's final packaging: evidential = cat((u, la, alpha, beta))
    evidential = jnp.concatenate([u, la, alpha, beta], axis=0)
    assert evidential.shape == (8, 16, 16)

    print("KERNEL_OK")
</pallas_src>

<mosaic_0001>
module attributes {stable_mosaic.version = 11 : i64} {
  func.func @_mish_kernel(%arg0: i32, %arg1: memref<8x256xf32, #tpu.memory_space<vmem>>, %arg2: memref<8x256xf32, #tpu.memory_space<vmem>>) attributes {dimension_semantics = [#tpu.dimension_semantics<parallel>], iteration_bounds = array<i64: 1>, scalar_prefetch = 0 : i64, scratch_operands = 0 : i64, tpu.core_type = #tpu.core_type<tc>, window_params = [{transform_indices = @transform_0, window_bounds = array<i64: 8, 256>}, {transform_indices = @transform_1, window_bounds = array<i64: 8, 256>}]} {
    %c0 = arith.constant 0 : index
    %c0_0 = arith.constant 0 : index
    %0 = vector.load %arg1[%c0, %c0_0] : memref<8x256xf32, #tpu.memory_space<vmem>>, vector<8x256xf32>
    %1 = math.absf %0 : vector<8x256xf32>
    %cst = arith.constant 0.000000e+00 : f32
    %2 = vector.broadcast %cst : f32 to vector<8x256xf32>
    %3 = arith.subf %2, %1 : vector<8x256xf32>
    %4 = math.exp %3 : vector<8x256xf32>
    %5 = arith.mulf %4, %4 : vector<8x256xf32>
    %cst_1 = arith.constant 0.000000e+00 : f32
    %6 = vector.broadcast %cst_1 : f32 to vector<8x256xf32>
    %7 = arith.cmpf ogt, %0, %6 : vector<8x256xf32>
    %cst_2 = arith.constant 2.000000e+00 : f32
    %8 = vector.broadcast %cst_2 : f32 to vector<8x256xf32>
    %9 = arith.mulf %8, %4 : vector<8x256xf32>
    %cst_3 = arith.constant 1.000000e+00 : f32
    %10 = vector.broadcast %cst_3 : f32 to vector<8x256xf32>
    %11 = arith.addf %10, %9 : vector<8x256xf32>
    %cst_4 = arith.constant 2.000000e+00 : f32
    %12 = vector.broadcast %cst_4 : f32 to vector<8x256xf32>
    %13 = arith.mulf %12, %4 : vector<8x256xf32>
    %14 = arith.addf %5, %13 : vector<8x256xf32>
    %15 = arith.select %7, %11, %14 : vector<8x256xi1>, vector<8x256xf32>
    %cst_5 = arith.constant 2.000000e+00 : f32
    %16 = vector.broadcast %cst_5 : f32 to vector<8x256xf32>
    %17 = arith.mulf %16, %4 : vector<8x256xf32>
    %cst_6 = arith.constant 1.000000e+00 : f32
    %18 = vector.broadcast %cst_6 : f32 to vector<8x256xf32>
    %19 = arith.addf %18, %17 : vector<8x256xf32>
    %cst_7 = arith.constant 2.000000e+00 : f32
    %20 = vector.broadcast %cst_7 : f32 to vector<8x256xf32>
    %21 = arith.mulf %20, %5 : vector<8x256xf32>
    %22 = arith.addf %19, %21 : vector<8x256xf32>
    %cst_8 = arith.constant 2.000000e+00 : f32
    %23 = vector.broadcast %cst_8 : f32 to vector<8x256xf32>
    %24 = arith.mulf %23, %4 : vector<8x256xf32>
    %25 = arith.addf %5, %24 : vector<8x256xf32>
    %cst_9 = arith.constant 2.000000e+00 : f32
    %26 = vector.broadcast %cst_9 : f32 to vector<8x256xf32>
    %27 = arith.addf %25, %26 : vector<8x256xf32>
    %28 = arith.select %7, %22, %27 : vector<8x256xi1>, vector<8x256xf32>
    %29 = tpu.reciprocal %28 {approx = true} : vector<8x256xf32> -> vector<8x256xf32>
    %30 = arith.mulf %28, %29 : vector<8x256xf32>
    %cst_10 = arith.constant 2.000000e+00 : f32
    %31 = vector.broadcast %cst_10 : f32 to vector<8x256xf32>
    %32 = arith.subf %31, %30 : vector<8x256xf32>
    %33 = arith.mulf %29, %32 : vector<8x256xf32>
    %34 = arith.mulf %28, %33 : vector<8x256xf32>
    %cst_11 = arith.constant 2.000000e+00 : f32
    %35 = vector.broadcast %cst_11 : f32 to vector<8x256xf32>
    %36 = arith.subf %35, %34 : vector<8x256xf32>
    %37 = arith.mulf %33, %36 : vector<8x256xf32>
    %38 = arith.mulf %0, %15 : vector<8x256xf32>
    %39 = arith.mulf %38, %37 : vector<8x256xf32>
    %c0_12 = arith.constant 0 : index
    %c0_13 = arith.constant 0 : index
    %40 = vector.load %arg2[%c0_12, %c0_13] : memref<8x256xf32, #tpu.memory_space<vmem>>, vector<8x256xf32>
    tpu.vector_store %arg2[%c0_12, %c0_13], %39 {strides = array<i32>} : memref<8x256xf32, #tpu.memory_space<vmem>>, vector<8x256xf32>,
    return
  }
  func.func @transform_0(%arg0: i32) -> (i32, i32) {
    %c0_i32 = arith.constant 0 : i32
    %c0_i32_0 = arith.constant 0 : i32
    return %arg0, %c0_i32 : i32, i32
  }
  func.func @transform_1(%arg0: i32) -> (i32, i32) {
    %c0_i32 = arith.constant 0 : i32
    %c0_i32_0 = arith.constant 0 : i32
    return %arg0, %c0_i32 : i32, i32
  }
}

</mosaic_0001>

<llo_original>
// kernel: tpu_custom_call.1
$region0: #{tpu_custom_call.1}
  #allocation0 [shape = 'u32[]', space=smem, size = 0x4, offset = 0x4, fixed_abs, tag = 'smem constant byte address 0x4 - core index']
  #allocation1 [shape = 'u32[72,128]{1,0:T(1,128)}', space=vmem, size = 0x9000, scoped, tag = 'internal scratch']
  %s0 = inlined_call_operand.hbm [shape: f32[8,256], index: 0, kind: input, shape index: {}]
  %s1 = inlined_call_operand.hbm [shape: f32[8,256], index: 1, kind: output, shape index: {}]
  %s2 = sld [smem:[#allocation0]]
  $region18: #{tpu_custom_call.1} parent=0
    _
  %s4 = ssub.s32 1, %s2
  %s5 = scalar_select 0, %s4, %s2
  $region1: #{tpu_custom_call.1} parent=0
    #allocation2 [shape = 'u8[8192]{0}', space=vmem, size = 0x2000, scoped, tag = 'input window, operand 0, single buffered']
    #allocation3 [shape = 's32[1]{0}', space=sflag, size = 0x4, scoped, tag = 'scoped memory for tpu_custom_call.1']
    #allocation4 [shape = 's32[1]{0}', space=sflag, size = 0x4, scoped, tag = 'scoped memory for tpu_custom_call.1']
    #allocation5 [shape = 'u8[8192]{0}', space=vmem, size = 0x2000, scoped, tag = 'output window, operand 0, single buffered']
    %6 = vsyncpa [#allocation3], 0
    %7 = vsyncpa [#allocation4], 0
    // Predicated region
    $region2: #{tpu_custom_call.1} parent=1 // pred_check
      _
    $region3: #{tpu_custom_call.1} parent=1 // pred_check_branch
      %9 = sbr.rel (0) target = $region5
    $region4: #{tpu_custom_call.1} parent=1 // pred_region
      %11 = vsyncadd [#allocation3], 0
      %s13 = sshll.u32 %s0, 4
      %s14 = int_to_ptr.hbm [resolvable:$true] %s13
      %s15 = sshll.u32 [#allocation2], 4
      %s16 = int_to_ptr.vmem [resolvable:$true] %s15
      %18 = dma.hbm_to_vmem [thread:$0]  %s14, 256, %s16, [#allocation3]
    $region5: #{tpu_custom_call.1} parent=1 // pred_fallthru
      _
    // Predicated region
    $region6: #{tpu_custom_call.1} parent=1 // pred_check
      _
    $region7: #{tpu_custom_call.1} parent=1 // pred_check_branch
      %20 = sbr.rel (0) target = $region9
    $region8: #{tpu_custom_call.1} parent=1 // pred_region
      %22 = dma.done [#allocation3], 256
    $region9: #{tpu_custom_call.1} parent=1 // pred_fallthru
      _
    %v23 = vld [vmem:[#allocation2] sm:$0xff]
    %v24 = vld [vmem:[#allocation2 + $0x8] sm:$0xff]
    %v25 = vand.u32 2147483647, %v23
    %v26 = vand.u32 2147483647, %v24
    %v27 = vsub.f32 0.0, %v25
    %v28 = vsub.f32 0.0, %v26
    %v29 = vmul.f32 %v27, 1.442695
    %v30 = vpow.pop %v29
    %v31 = vmul.f32 %v28, 1.442695
    %v32 = vpow.pop %v31
    %v33 = vmul.f32 %v30, %v30
    %v34 = vmul.f32 %v32, %v32
    %vm35 = vcmp.gt.f32.partialorder %v23, 0.0
    %vm36 = vcmp.gt.f32.partialorder %v24, 0.0
    %v37 = vmul.f32 %v30, 2.0
    %v38 = vmul.f32 %v32, 2.0
    %v39 = vadd.f32 %v37, 1.0
    %v40 = vadd.f32 %v38, 1.0
    %v41 = vadd.f32 %v33, %v37
    %v42 = vadd.f32 %v34, %v38
    %v43 = vsel %vm35, %v39, %v41
    %v44 = vsel %vm36, %v40, %v42
    %v45 = vmul.f32 %v33, 2.0
    %v46 = vmul.f32 %v34, 2.0
    %v47 = vadd.f32 %v39, %v45
    %v48 = vadd.f32 %v40, %v46
    %v49 = vadd.f32 %v41, 2.0
    %v50 = vadd.f32 %v42, 2.0
    %v51 = vsel %vm35, %v47, %v49
    %v52 = vsel %vm36, %v48, %v50
    %v53 = vrcp.pop %v51
    %v54 = vrcp.pop %v52
    %v55 = vmul.f32 %v51, %v53
    %v56 = vmul.f32 %v52, %v54
    %v57 = vsub.f32 2.0, %v55
    %v58 = vsub.f32 2.0, %v56
    %v59 = vmul.f32 %v53, %v57
    %v60 = vmul.f32 %v54, %v58
    %v61 = vmul.f32 %v51, %v59
    %v62 = vmul.f32 %v52, %v60
    %v63 = vsub.f32 2.0, %v61
    %v64 = vsub.f32 2.0, %v62
    %v65 = vmul.f32 %v59, %v63
    %v66 = vmul.f32 %v60, %v64
    %v67 = vmul.f32 %v23, %v43
    %v68 = vmul.f32 %v24, %v44
    %v69 = vmul.f32 %v67, %v65
    %v70 = vmul.f32 %v68, %v66
    %71 = vst [vmem:[#allocation5] sm:$0xff] %v69
    %72 = vst [vmem:[#allocation5 + $0x8] sm:$0xff] %v70
    // Predicated region
    $region10: #{tpu_custom_call.1} parent=1 // pred_check
      _
    $region11: #{tpu_custom_call.1} parent=1 // pred_check_branch
      %74 = sbr.rel (0) target = $region13
    $region12: #{tpu_custom_call.1} parent=1 // pred_region
      %76 = vsyncadd [#allocation4], 0
      %s78 = sshll.u32 [#allocation5], 4
      %s79 = int_to_ptr.vmem [resolvable:$true] %s78
      %s80 = sshll.u32 %s1, 4
      %s81 = int_to_ptr.hbm [resolvable:$true] %s80
      %83 = dma.vmem_to_hbm [thread:$0]  %s79, 256, %s81, [#allocation4]
    $region13: #{tpu_custom_call.1} parent=1 // pred_fallthru
      _
    // Predicated region
    $region14: #{tpu_custom_call.1} parent=1 // pred_check
      _
    $region15: #{tpu_custom_call.1} parent=1 // pred_check_branch
      %85 = sbr.rel (0) target = $region17
    $region16: #{tpu_custom_call.1} parent=1 // pred_region
      %87 = dma.done [#allocation4], 256
    $region17: #{tpu_custom_call.1} parent=1 // pred_fallthru
      _
    %88 = vsyncpa [#allocation3], 1
    %89 = vsyncpa [#allocation4], 1

</llo_original>
